<compile_context>
chip_gen: v7x
topology: tpu7x:2x2x1
jax: 0.10.0
libtpu: 0.0.40
codegen_flags: <defaults>
</compile_context>

<pallas_src>
import functools

import jax
import jax.numpy as jnp
from jax import lax
from jax.experimental import pallas as pl
from jax.experimental.pallas import tpu as pltpu


# ---------------------------------------------------------------------------
# pltpu.roll direction probe (one tiny kernel, run once and cached)
# ---------------------------------------------------------------------------
_ROLL_NEEDS_FLIP = None


def _roll_probe_kernel(x_ref, o_ref):
    o_ref[...] = pltpu.roll(x_ref[...], 1, axis=1)


def _pltpu_roll_needs_flip():
    """The tap logic needs jnp.roll semantics: out[:, p] == in[:, (p - s) % n].

    pltpu.roll matches that on current JAX, but we probe once at runtime so the
    reflection handling is independent of the lowering's sign convention."""
    global _ROLL_NEEDS_FLIP
    if _ROLL_NEEDS_FLIP is None:
        x = lax.broadcasted_iota(jnp.float32, (8, 128), 1)
        y = pl.pallas_call(
            _roll_probe_kernel,
            out_shape=jax.ShapeDtypeStruct((8, 128), jnp.float32),
        )(x)
        # jnp.roll convention puts 127 at lane 0; the opposite puts 1 there.
        _ROLL_NEEDS_FLIP = bool(jax.device_get(y[0, 0]) != 127.0)
    return _ROLL_NEEDS_FLIP


# ---------------------------------------------------------------------------
# Fused kernel
# ---------------------------------------------------------------------------
def _upsample_conv_kernel(x_ref, e_ref, w_ref, b_ref, o_ref, im2col_ref, *,
                          n_imgs, cin, oh, ow, roll_flip, mxu_dtype):
    # x_ref:      (n_imgs, cin, H*W)     raw NCHW input, spatial flattened
    # e_ref:      (H*W, OH*OW)           nearest-upsample expansion operator
    # w_ref:      (cout, 9*cin)          conv weights, tap-major (kh, kw, cin)
    # b_ref:      (cout, 1)              bias, f32
    # o_ref:      (n_imgs, cout, OH*OW)  NCHW output, lane-dense spatial
    # im2col_ref: (9*cin, OH*OW) f32     VMEM scratch the taps stream into
    f32 = jnp.float32
    ohw = oh * ow

    def lane_roll(v, shift):
        # jnp.roll semantics along lanes: out[:, p] = v[:, (p - shift) % ohw]
        s = shift % ohw
        if s == 0:
            return v
        if roll_flip:
            s = ohw - s
        return pltpu.roll(v, s, axis=1)

    # Boundary masks: grid-step invariant, hoisted out of the per-image loop.
    # (A handful of VPU ops on 8 vregs; passing them as prefetched constants
    # only pays off for much larger batches.)
    lane = lax.broadcasted_iota(jnp.int32, (1, ohw), 1)
    col = lane % ow
    first_col = col == 0
    last_col = col == ow - 1
    first_row = lane < ow
    last_row = lane >= (oh - 1) * ow

    e_op = e_ref[...]                     # (H*W, OHW), VMEM-resident operand
    w_op = w_ref[...]                     # (cout, 9*cin)
    bias = b_ref[...].astype(f32)         # (cout, 1)

    for b in range(n_imgs):               # static unroll over images in block
        # ---- nearest xUP upsample: ONE MXU dot against the expansion op ----
        xb = x_ref[b].astype(mxu_dtype)                       # (cin, H*W)
        up = jnp.dot(xb, e_op, preferred_element_type=f32)    # (cin, OHW) f32

        # ---- reflection pad (pad=1): XLU lane rolls + boundary selects ------
        up_m = lane_roll(up, ow)      # value from one output row above
        dn_m = lane_roll(up, -ow)     # value from one output row below
        rows = (
            jnp.where(first_row, dn_m, up_m),   # kh = 0 (row-1, reflect top)
            up,                                  # kh = 1
            jnp.where(last_row, up_m, dn_m),     # kh = 2 (row+1, reflect bottom)
        )

        # ---- stream the 9 taps straight into the VMEM im2col scratch --------
        # (no 9-tap live set, no axis-0 concatenate of half-tile pieces)
        for kh, r in enumerate(rows):
            lft = lane_roll(r, 1)     # value one column to the left
            rgt = lane_roll(r, -1)    # value one column to the right
            base = kh * 3 * cin
            im2col_ref[pl.ds(base + 0 * cin, cin), :] = jnp.where(first_col, rgt, lft)
            im2col_ref[pl.ds(base + 1 * cin, cin), :] = r
            im2col_ref[pl.ds(base + 2 * cin, cin), :] = jnp.where(last_col, lft, rgt)

        # ---- 3x3 conv: single (cout, 9*cin) @ (9*cin, OHW) MXU dot + bias ---
        # Cast only at the matmul boundary (keeps VPU-side work f32; v5e-safe).
        im2col = im2col_ref[...].astype(mxu_dtype)
        acc = jnp.dot(w_op, im2col, preferred_element_type=f32)   # (cout, OHW)
        o_ref[b] = (acc + bias).astype(o_ref.dtype)


# ---------------------------------------------------------------------------
# Wrapper
# ---------------------------------------------------------------------------
def _make_expand_operator(H, W, UP, OH, OW, dtype):
    """E[q, p] = 1 iff input pixel q is the nearest-neighbour source of output
    pixel p (both spatially flattened), so that x_flat @ E == upsample(x)_flat."""
    p = jnp.arange(OH * OW, dtype=jnp.int32)
    src = (p // OW // UP) * W + (p % OW) // UP
    q = jnp.arange(H * W, dtype=jnp.int32)
    return (q[:, None] == src[None, :]).astype(dtype)          # (H*W, OH*OW)


def upsample_conv(x, w_oihw, b, *, kernel_size, stride, upsample,
                  block_images=None, mxu_dtype=jnp.float32):
    """UpsampleConv forward: nearest-upsample -> ReflectionPad2d(k//2) -> Conv2d.

    x:         (N, Cin, H, W) float32 (NCHW, as the PyTorch module)
    w_oihw:    (Cout, Cin, KH, KW) float32 (nn.Conv2d weight layout)
    b:         (Cout,) float32
    mxu_dtype: dtype of the MXU matmul operands; jnp.bfloat16 is the native MXU
               path on v6e/v7x, float32 for bit-accuracy (and v5e default).
    returns    (N, Cout, OH, OW) float32 (NCHW)
    """
    N, Cin, H, W = x.shape
    Cout, _, KH, KW = w_oihw.shape
    if kernel_size != 3 or stride != 1:
        # TODO(synk): generalize the in-kernel tap extraction to stride>1 / k!=3.
        raise NotImplementedError("Pallas kernel implemented for kernel_size=3, stride=1")
    UP = int(upsample)
    pad = kernel_size // 2
    OH = H * UP + 2 * pad - KH + 1          # == H * UP
    OW = W * UP + 2 * pad - KW + 1          # == W * UP
    OHW = OH * OW
    if OH < 2 or OW < 2:
        raise NotImplementedError("reflection handling assumes OH >= 2 and OW >= 2")

    # Images per grid step: amortize the per-step overhead, but keep >= 2 grid
    # steps whenever possible so both v7x TensorCores get work.
    if block_images is None:
        block_images = 1
        for cand in (8, 4, 2):
            if N % cand == 0 and N // cand >= 2:
                block_images = cand
                break
    B = block_images
    if N % B != 0:
        raise ValueError(f"block_images={B} must divide batch size {N}")

    x3 = x.reshape(N, Cin, H * W)                                    # free reshape
    # weight rows in tap-major order (kh, kw, cin) to match the im2col scratch
    w2d = jnp.transpose(w_oihw, (0, 2, 3, 1)).reshape(Cout, KH * KW * Cin)
    w2d = w2d.astype(mxu_dtype)
    b2 = b.reshape(Cout, 1).astype(jnp.float32)
    expand = _make_expand_operator(H, W, UP, OH, OW, mxu_dtype)      # (H*W, OHW)

    kernel = functools.partial(
        _upsample_conv_kernel, n_imgs=B, cin=Cin, oh=OH, ow=OW,
        roll_flip=_pltpu_roll_needs_flip(), mxu_dtype=mxu_dtype)

    # TODO(synk): for production-sized H/W/Cin, tile OH into 8-row bands with a
    # 1-row halo instead of keeping the whole upsampled image resident (v7x has
    # only 64 MiB VMEM); at these shapes the per-step footprint is < 2 MiB.
    out = pl.pallas_call(
        kernel,
        out_shape=jax.ShapeDtypeStruct((N, Cout, OHW), x.dtype),
        grid_spec=pltpu.PrefetchScalarGridSpec(
            num_scalar_prefetch=0,
            grid=(N // B,),                          # one block of images per step
            in_specs=[
                pl.BlockSpec((B, Cin, H * W), lambda n: (n, 0, 0)),
                pl.BlockSpec((H * W, OHW), lambda n: (0, 0)),        # resident
                pl.BlockSpec((Cout, KH * KW * Cin), lambda n: (0, 0)),
                pl.BlockSpec((Cout, 1), lambda n: (0, 0)),
            ],
            out_specs=pl.BlockSpec((B, Cout, OHW), lambda n: (n, 0, 0)),
            scratch_shapes=[pltpu.VMEM((KH * KW * Cin, OHW), jnp.float32)],
        ),
        compiler_params=pltpu.CompilerParams(
            dimension_semantics=("parallel",),       # v7x: split batch over 2 TCs
        ),
    )(x3, expand, w2d, b2)

    return out.reshape(N, Cout, OH, OW)                              # free reshape


def upsample_conv_reference(x, w_oihw, b, *, kernel_size, stride, upsample):
    """Pure-JAX reference (lax.conv on NCHW) for correctness checking."""
    xu = jnp.repeat(jnp.repeat(x, upsample, axis=2), upsample, axis=3)
    pad = kernel_size // 2
    xp = jnp.pad(xu, ((0, 0), (0, 0), (pad, pad), (pad, pad)), mode="reflect")
    out = jax.lax.conv_general_dilated(
        xp, w_oihw, window_strides=(stride, stride), padding="VALID",
        dimension_numbers=("NCHW", "OIHW", "NCHW"),
    )
    return out + b.reshape(1, -1, 1, 1)


if __name__ == "__main__":
    # Module config: UpsampleConv(in_channels=4, out_channels=8, kernel_size=3,
    #                             stride=1, upsample=2)
    in_channels, out_channels = 4, 8
    kernel_size, stride, upsample = 3, 1, 2
    H, W = 16, 16

    key = jax.random.PRNGKey(0)
    kx1, kx2, kw, kb = jax.random.split(key, 4)

    # nn.Conv2d-style init, kept in the PyTorch OIHW layout.
    fan_in = in_channels * kernel_size * kernel_size
    bound = 1.0 / (fan_in ** 0.5)
    w = jax.random.uniform(kw, (out_channels, in_channels, kernel_size, kernel_size),
                           dtype=jnp.float32, minval=-bound, maxval=bound)
    b = jax.random.uniform(kb, (out_channels,), dtype=jnp.float32,
                           minval=-bound, maxval=bound)

    # --- test 1: canonical config (N=2 -> 1 image/step, 2 grid steps), f32 MXU
    x1 = jax.random.normal(kx1, (2, in_channels, H, W), dtype=jnp.float32)
    out1 = jax.block_until_ready(
        upsample_conv(x1, w, b, kernel_size=kernel_size, stride=stride,
                      upsample=upsample))
    ref1 = jax.block_until_ready(
        upsample_conv_reference(x1, w, b, kernel_size=kernel_size, stride=stride,
                                upsample=upsample))
    assert out1.shape == (2, out_channels, H * upsample, W * upsample), out1.shape
    assert jnp.allclose(out1, ref1, rtol=1e-5, atol=1e-4), "f32 kernel mismatch"

    # --- test 2: image blocking (N=8 -> 4 images/step, 2 grid steps) and the
    #             bf16 MXU-operand path (v6e/v7x native MXU dtype).
    x2 = jax.random.normal(kx2, (8, in_channels, H, W), dtype=jnp.float32)
    out2 = jax.block_until_ready(
        upsample_conv(x2, w, b, kernel_size=kernel_size, stride=stride,
                      upsample=upsample, mxu_dtype=jnp.bfloat16))
    ref2 = jax.block_until_ready(
        upsample_conv_reference(x2, w, b, kernel_size=kernel_size, stride=stride,
                                upsample=upsample))
    assert out2.shape == (8, out_channels, H * upsample, W * upsample), out2.shape
    assert jnp.allclose(out2, ref2, rtol=5e-2, atol=5e-2), "bf16 kernel mismatch"

    print("KERNEL_OK")
</pallas_src>

<mosaic_0001>
module attributes {stable_mosaic.version = 11 : i64} {
  func.func @_roll_probe_kernel(%arg0: memref<8x128xf32, #tpu.memory_space<vmem>>, %arg1: memref<8x128xf32, #tpu.memory_space<vmem>>) attributes {dimension_semantics = [], scalar_prefetch = 0 : i64, scratch_operands = 0 : i64, tpu.core_type = #tpu.core_type<tc>} {
    %c0 = arith.constant 0 : index
    %c0_0 = arith.constant 0 : index
    %0 = vector.load %arg0[%c0, %c0_0] : memref<8x128xf32, #tpu.memory_space<vmem>>, vector<8x128xf32>
    %c1_i32 = arith.constant 1 : i32
    %1 = tpu.dynamic_rotate %0 by %c1_i32 dim 1 : vector<8x128xf32>, i32 -> vector<8x128xf32>
    %c0_1 = arith.constant 0 : index
    %c0_2 = arith.constant 0 : index
    %2 = vector.load %arg1[%c0_1, %c0_2] : memref<8x128xf32, #tpu.memory_space<vmem>>, vector<8x128xf32>
    tpu.vector_store %arg1[%c0_1, %c0_2], %1 {strides = array<i32>} : memref<8x128xf32, #tpu.memory_space<vmem>>, vector<8x128xf32>,
    return
  }
}

</mosaic_0001>

<llo_original>
// kernel: tpu_custom_call.1
$region0: #{tpu_custom_call.1}
  #allocation0 [shape = 'u32[]', space=smem, size = 0x4, offset = 0x4, fixed_abs, tag = 'smem constant byte address 0x4 - core index']
  #allocation1 [shape = 'u32[144,128]{1,0:T(1,128)}', space=vmem, size = 0x12000, scoped, tag = 'internal scratch']
  %s0 = inlined_call_operand.hbm [shape: f32[8,128], index: 0, kind: input, shape index: {}]
  %s1 = inlined_call_operand.hbm [shape: f32[8,128], index: 1, kind: output, shape index: {}]
  %s2 = sld [smem:[#allocation0]]
  $region18: #{tpu_custom_call.1} parent=0
    _
  %s4 = ssub.s32 1, %s2
  %s5 = scalar_select 0, %s4, %s2
  $region1: #{tpu_custom_call.1} parent=0
    #allocation2 [shape = 'u8[4096]{0}', space=vmem, size = 0x1000, scoped, tag = 'input window, operand 0, single buffered']
    #allocation3 [shape = 's32[1]{0}', space=sflag, size = 0x4, scoped, tag = 'scoped memory for tpu_custom_call.1']
    #allocation4 [shape = 's32[1]{0}', space=sflag, size = 0x4, scoped, tag = 'scoped memory for tpu_custom_call.1']
    #allocation5 [shape = 'u8[4096]{0}', space=vmem, size = 0x1000, scoped, tag = 'output window, operand 0, single buffered']
    %6 = vsyncpa [#allocation3], 0
    %7 = vsyncpa [#allocation4], 0
    // Predicated region
    $region2: #{tpu_custom_call.1} parent=1 // pred_check
      _
    $region3: #{tpu_custom_call.1} parent=1 // pred_check_branch
      %9 = sbr.rel (0) target = $region5
    $region4: #{tpu_custom_call.1} parent=1 // pred_region
      %s11 = ssub.s32 128, 128
      %12 = vsyncadd [#allocation3], %s11
      %s14 = sshll.u32 [#allocation2], 4
      %s15 = int_to_ptr.vmem [resolvable:$true] %s14
      %17 = dma.hbm_to_vmem [thread:$0]  %s0, 128, %s15, [#allocation3]
    $region5: #{tpu_custom_call.1} parent=1 // pred_fallthru
      _
    // Predicated region
    $region6: #{tpu_custom_call.1} parent=1 // pred_check
      _
    $region7: #{tpu_custom_call.1} parent=1 // pred_check_branch
      %19 = sbr.rel (0) target = $region9
    $region8: #{tpu_custom_call.1} parent=1 // pred_region
      %20 = dma.done [#allocation3], 128
    $region9: #{tpu_custom_call.1} parent=1 // pred_fallthru
      _
    %v21 = vld [vmem:[#allocation2] sm:$0xff]
    %22 = vrot.lane.b32.xlu0 %v21, 1
    %v23 = vpop.permute.xlu0 %22
    %24 = vst [vmem:[#allocation5] sm:$0xff] %v23
    // Predicated region
    $region10: #{tpu_custom_call.1} parent=1 // pred_check
      _
    $region11: #{tpu_custom_call.1} parent=1 // pred_check_branch
      %26 = sbr.rel (0) target = $region13
    $region12: #{tpu_custom_call.1} parent=1 // pred_region
      %s28 = ssub.s32 128, 128
      %29 = vsyncadd [#allocation4], %s28
      %s31 = sshll.u32 [#allocation5], 4
      %s32 = int_to_ptr.vmem [resolvable:$true] %s31
      %34 = dma.vmem_to_hbm [thread:$0]  %s32, 128, %s1, [#allocation4]
    $region13: #{tpu_custom_call.1} parent=1 // pred_fallthru
      _
    // Predicated region
    $region14: #{tpu_custom_call.1} parent=1 // pred_check
      _
    $region15: #{tpu_custom_call.1} parent=1 // pred_check_branch
      %36 = sbr.rel (0) target = $region17
    $region16: #{tpu_custom_call.1} parent=1 // pred_region
      %37 = dma.done [#allocation4], 128
    $region17: #{tpu_custom_call.1} parent=1 // pred_fallthru
      _
    %38 = vsyncpa [#allocation3], 1
    %39 = vsyncpa [#allocation4], 1

</llo_original>
